<compile_context>
chip_gen: v7x
topology: tpu7x:2x2x1
jax: 0.10.0
libtpu: 0.0.40
codegen_flags: <defaults>
</compile_context>

<pallas_src>
import jax
import jax.numpy as jnp
from jax.experimental import pallas as pl
from jax.experimental.pallas import tpu as pltpu


def persite_kernel(ids_ref, mask_ref, w1f_ref, w2_ref, lsr_ref, o_ref):
    kmer_pad = w1f_ref.shape[1]
    tl = ids_ref.shape[1]

    # In-kernel embedding gather as a one-hot matmul.  Build the one-hot
    # directly from the compare (no f32 select, no extra downcast pass).
    ids = ids_ref[...]                                                     # (1, TL) int32
    kmer_iota = jax.lax.broadcasted_iota(jnp.int32, (kmer_pad, tl), 0)
    onehot = (kmer_iota == ids).astype(jnp.bfloat16)                       # (KP, TL) bf16

    # Folded embedding + first layer (+ bias): one bf16 MXU matmul.
    # Valid because every one-hot column has exactly one 1 (ids < KMERS).
    h = jnp.dot(w1f_ref[...], onehot, preferred_element_type=jnp.float32)  # (H, TL) f32
    h = jnp.maximum(h, 0.0)

    # 1-row head on the MXU (VALU is the binding slot; MXU has slack).
    z = jnp.dot(w2_ref[...], h, preferred_element_type=jnp.float32)        # (1, TL) f32

    # PersiteWrapper + base-model exp, fused: exp(z + b2 + log_site_rates),
    # multiplied by the mask value (matches exp(z)*masks exactly).
    o_ref[...] = mask_ref[...] * jnp.exp(z + lsr_ref[...])


def _pick_batch_tile(batch, site_count, target_lanes):
    """Pick TB dividing batch with TB*S lanes <= target and 128-aligned.

    Prefers TB <= batch//2 so the grid has >= 2 steps (v7x has 2 TensorCores;
    a single grid step would idle one of them).  Falls back to the whole batch
    (single full-array block, always legal).
    """
    def ok(tb):
        tl = tb * site_count
        return batch % tb == 0 and tl <= target_lanes and tl % 128 == 0

    for cap in (max(batch // 2, 1), batch):
        for cand in range(cap, 0, -1):
            if ok(cand):
                return cand
    return batch


def persite_wrapper_forward(encoded_parents, masks, params, *, target_lanes=16384):
    B, S = encoded_parents.shape
    KMERS, E = params["embedding"].shape
    H = params["w1"].shape[0]
    BS = B * S

    TB = _pick_batch_tile(B, S, target_lanes)
    TL = TB * S
    grid = (B // TB,)

    # --- tiny one-time parameter prep (not per-element HBM traffic) ---------
    kmer_pad = ((KMERS + 127) // 128) * 128
    # Fold embedding + first linear layer + bias into one bf16 per-kmer table:
    #   W1f[h, k] = sum_e w1[h, e] * embedding[k, e] + b1[h]
    # Padded kmer columns are zero and never selected.
    w1f = jnp.dot(params["w1"], params["embedding"].T,
                  precision=jax.lax.Precision.HIGHEST) + params["b1"]      # (H, KMERS) f32
    w1f_pad = jnp.zeros((H, kmer_pad), jnp.bfloat16).at[:, :KMERS].set(
        w1f.astype(jnp.bfloat16))
    # Per-site log rates with the head bias folded in, tiled to exactly one
    # lane block (TB copies, not B copies); stays VMEM-resident.
    lsr = jnp.tile(params["log_site_rates"].T + params["b2"][0, 0],
                   (1, TB)).astype(jnp.float32)                            # (1, TL)
    w2_row = params["w2"].astype(jnp.float32)                              # (1, H)

    # --- streamed activations ----------------------------------------------
    ids2d = encoded_parents.reshape(1, BS).astype(jnp.int32)
    mask2d = masks.astype(jnp.float32).reshape(1, BS)

    # Explicit VMEM budget: double-buffered streams + big per-step
    # intermediates (bf16 one-hot, f32 h) + resident params, clipped to
    # 48 MiB so it stays safe on v7x's 64 MiB physical VMEM.
    step_bytes = (
        2 * 2 * 4 * TL                      # ids + mask streams (double-buffered)
        + 2 * 4 * TL                        # out (double-buffered)
        + 2 * kmer_pad * TL                 # onehot bf16
        + 4 * H * TL + 4 * TL               # h f32, z f32
        + 2 * H * kmer_pad + 4 * H + 4 * TL # resident W1f / w2 / lsr
    )
    vmem_limit = int(min(max(2 * step_bytes, 32 << 20), 48 << 20))

    out2d = pl.pallas_call(
        persite_kernel,
        out_shape=jax.ShapeDtypeStruct((1, BS), jnp.float32),
        grid=grid,
        in_specs=[
            pl.BlockSpec((1, TL), lambda i: (0, i)),          # ids    (streamed)
            pl.BlockSpec((1, TL), lambda i: (0, i)),          # mask   (streamed)
            pl.BlockSpec((H, kmer_pad), lambda i: (0, 0)),    # W1f    (resident)
            pl.BlockSpec((1, H), lambda i: (0, 0)),           # w2     (resident)
            pl.BlockSpec((1, TL), lambda i: (0, 0)),          # lsr+b2 (resident)
        ],
        out_specs=pl.BlockSpec((1, TL), lambda i: (0, i)),
        compiler_params=pltpu.CompilerParams(
            dimension_semantics=("parallel",),
            vmem_limit_bytes=vmem_limit,
        ),
    )(ids2d, mask2d, w1f_pad, w2_row, lsr)

    return out2d.reshape(B, S)                                             # (batch, site_count)


def persite_wrapper_reference(encoded_parents, masks, params):
    """Pure-JAX reference matching the PyTorch semantics, with the same bf16
    parameter-folding precision the kernel uses (everything else in f32)."""
    w1f = (jnp.dot(params["w1"], params["embedding"].T,
                   precision=jax.lax.Precision.HIGHEST)
           + params["b1"]).astype(jnp.bfloat16).astype(jnp.float32)        # (H, K)
    hpre = w1f[:, encoded_parents]                                          # (H, B, S)
    h = jnp.maximum(hpre, 0.0)
    z = jnp.einsum("h,hbs->bs", params["w2"][0], h,
                   precision=jax.lax.Precision.HIGHEST) + params["b2"][0, 0]
    base_rates = jnp.exp(z) * masks.astype(jnp.float32)
    return base_rates * jnp.exp(params["log_site_rates"].T)                 # (1, S) broadcast


def make_params(key, site_count, kmer_count, embed_dim, hidden_dim):
    ks = jax.random.split(key, 5)
    return {
        # Synthetic base-model parameters (deterministic init).
        "embedding": 0.1 * jax.random.normal(ks[0], (kmer_count, embed_dim), jnp.float32),
        "w1": 0.1 * jax.random.normal(ks[1], (hidden_dim, embed_dim), jnp.float32),
        "b1": jnp.zeros((hidden_dim, 1), jnp.float32),
        "w2": 0.1 * jax.random.normal(ks[2], (1, hidden_dim), jnp.float32),
        "b2": jnp.zeros((1, 1), jnp.float32),
        # PersiteWrapper parameter: nn.Embedding(site_count, 1).weight -> (S, 1).
        "log_site_rates": 0.1 * jax.random.normal(ks[3], (site_count, 1), jnp.float32),
    }


if __name__ == "__main__":
    B, S = 4, 128          # batch, site_count
    KMERS, E, H = 65, 16, 32

    key = jax.random.PRNGKey(0)
    k_par, k_mask, k_params = jax.random.split(key, 3)

    encoded_parents = jax.random.randint(k_par, (B, S), 0, KMERS, dtype=jnp.int32)
    masks = (jax.random.uniform(k_mask, (B, S)) > 0.1).astype(jnp.float32)
    params = make_params(k_params, S, KMERS, E, H)

    rates = persite_wrapper_forward(encoded_parents, masks, params)
    rates = jax.block_until_ready(rates)

    ref = persite_wrapper_reference(encoded_parents, masks, params)
    assert rates.shape == (B, S)
    if not jnp.allclose(rates, ref, rtol=1e-3, atol=1e-3):
        err = float(jnp.max(jnp.abs(rates - ref)))
        raise AssertionError(f"Pallas kernel does not match JAX reference (max abs err {err})")

    print("KERNEL_OK")
</pallas_src>

<mosaic_0001>
module attributes {stable_mosaic.version = 11 : i64} {
  func.func @persite_kernel(%arg0: i32, %arg1: memref<1x256xi32, #tpu.memory_space<vmem>>, %arg2: memref<1x256xf32, #tpu.memory_space<vmem>>, %arg3: memref<32x128xbf16, #tpu.memory_space<vmem>>, %arg4: memref<1x32xf32, #tpu.memory_space<vmem>>, %arg5: memref<1x256xf32, #tpu.memory_space<vmem>>, %arg6: memref<1x256xf32, #tpu.memory_space<vmem>>) attributes {dimension_semantics = [#tpu.dimension_semantics<parallel>], iteration_bounds = array<i64: 2>, scalar_prefetch = 0 : i64, scratch_operands = 0 : i64, tpu.core_type = #tpu.core_type<tc>, window_params = [{transform_indices = @transform_0, window_bounds = array<i64: 1, 256>}, {transform_indices = @transform_1, window_bounds = array<i64: 1, 256>}, {pipeline_mode = #tpu.pipeline_mode<synchronous>, transform_indices = @transform_2, window_bounds = array<i64: 32, 128>}, {pipeline_mode = #tpu.pipeline_mode<synchronous>, transform_indices = @transform_3, window_bounds = array<i64: 1, 32>}, {pipeline_mode = #tpu.pipeline_mode<synchronous>, transform_indices = @transform_4, window_bounds = array<i64: 1, 256>}, {transform_indices = @transform_5, window_bounds = array<i64: 1, 256>}]} {
    %c0 = arith.constant 0 : index
    %c0_0 = arith.constant 0 : index
    %0 = vector.load %arg1[%c0, %c0_0] : memref<1x256xi32, #tpu.memory_space<vmem>>, vector<1x256xi32>
    %1 = tpu.iota {dimensions = array<i32: 0>} : vector<128x256xi32>
    %2 = vector.broadcast %0 : vector<1x256xi32> to vector<128x256xi32>
    %3 = arith.cmpi eq, %1, %2 : vector<128x256xi32>
    %4 = arith.extui %3 : vector<128x256xi1> to vector<128x256xi32>
    %5 = arith.sitofp %4 : vector<128x256xi32> to vector<128x256xf32>
    %6 = arith.truncf %5 : vector<128x256xf32> to vector<128x256xbf16>
    %c0_1 = arith.constant 0 : index
    %c0_2 = arith.constant 0 : index
    %7 = vector.load %arg3[%c0_1, %c0_2] : memref<32x128xbf16, #tpu.memory_space<vmem>>, vector<32x128xbf16>
    %cst = arith.constant dense<0.000000e+00> : vector<32x256xf32>
    %8 = tpu.matmul %7, %6, %cst {dimension_numbers = #tpu.dot_dimension_numbers<[1], [0], [0], [1], [0, 0, 1, 1], [], []>} : vector<32x128xbf16>, vector<128x256xbf16>, vector<32x256xf32> -> vector<32x256xf32>
    %cst_3 = arith.constant 0.000000e+00 : f32
    %9 = vector.broadcast %cst_3 : f32 to vector<32x256xf32>
    %10 = arith.maximumf %8, %9 : vector<32x256xf32>
    %c0_4 = arith.constant 0 : index
    %c0_5 = arith.constant 0 : index
    %11 = vector.load %arg4[%c0_4, %c0_5] : memref<1x32xf32, #tpu.memory_space<vmem>>, vector<1x32xf32>
    %cst_6 = arith.constant dense<0.000000e+00> : vector<1x256xf32>
    %12 = tpu.matmul %11, %10, %cst_6 {dimension_numbers = #tpu.dot_dimension_numbers<[1], [0], [0], [1], [0, 0, 1, 1], [], []>} : vector<1x32xf32>, vector<32x256xf32>, vector<1x256xf32> -> vector<1x256xf32>
    %c0_7 = arith.constant 0 : index
    %c0_8 = arith.constant 0 : index
    %13 = vector.load %arg2[%c0_7, %c0_8] : memref<1x256xf32, #tpu.memory_space<vmem>>, vector<1x256xf32>
    %c0_9 = arith.constant 0 : index
    %c0_10 = arith.constant 0 : index
    %14 = vector.load %arg5[%c0_9, %c0_10] : memref<1x256xf32, #tpu.memory_space<vmem>>, vector<1x256xf32>
    %15 = arith.addf %12, %14 : vector<1x256xf32>
    %16 = math.exp %15 : vector<1x256xf32>
    %17 = arith.mulf %13, %16 : vector<1x256xf32>
    %c0_11 = arith.constant 0 : index
    %c0_12 = arith.constant 0 : index
    %18 = vector.load %arg6[%c0_11, %c0_12] : memref<1x256xf32, #tpu.memory_space<vmem>>, vector<1x256xf32>
    tpu.vector_store %arg6[%c0_11, %c0_12], %17 {strides = array<i32>} : memref<1x256xf32, #tpu.memory_space<vmem>>, vector<1x256xf32>,
    return
  }
  func.func @transform_0(%arg0: i32) -> (i32, i32) {
    %c0_i32 = arith.constant 0 : i32
    %c0_i32_0 = arith.constant 0 : i32
    return %c0_i32, %arg0 : i32, i32
  }
  func.func @transform_1(%arg0: i32) -> (i32, i32) {
    %c0_i32 = arith.constant 0 : i32
    %c0_i32_0 = arith.constant 0 : i32
    return %c0_i32, %arg0 : i32, i32
  }
  func.func @transform_2(%arg0: i32) -> (i32, i32) {
    %c0_i32 = arith.constant 0 : i32
    %c0_i32_0 = arith.constant 0 : i32
    %c0_i32_1 = arith.constant 0 : i32
    return %c0_i32, %c0_i32_0 : i32, i32
  }
  func.func @transform_3(%arg0: i32) -> (i32, i32) {
    %c0_i32 = arith.constant 0 : i32
    %c0_i32_0 = arith.constant 0 : i32
    %c0_i32_1 = arith.constant 0 : i32
    return %c0_i32, %c0_i32_0 : i32, i32
  }
  func.func @transform_4(%arg0: i32) -> (i32, i32) {
    %c0_i32 = arith.constant 0 : i32
    %c0_i32_0 = arith.constant 0 : i32
    %c0_i32_1 = arith.constant 0 : i32
    return %c0_i32, %c0_i32_0 : i32, i32
  }
  func.func @transform_5(%arg0: i32) -> (i32, i32) {
    %c0_i32 = arith.constant 0 : i32
    %c0_i32_0 = arith.constant 0 : i32
    return %c0_i32, %arg0 : i32, i32
  }
}

</mosaic_0001>

<llo_original>
// kernel: tpu_custom_call.1
$region0: #{tpu_custom_call.1}
  #allocation0 [shape = 'u32[]', space=smem, size = 0x4, offset = 0x4, fixed_abs, tag = 'smem constant byte address 0x4 - core index']
  #allocation1 [shape = 'u32[144,128]{1,0:T(1,128)}', space=vmem, size = 0x12000, scoped, tag = 'internal scratch']
  %s0 = inlined_call_operand.hbm [shape: s32[1,512], index: 0, kind: input, shape index: {}]
  %s1 = inlined_call_operand.hbm [shape: f32[1,512], index: 1, kind: input, shape index: {}]
  %s2 = inlined_call_operand.hbm [shape: bf16[32,128], index: 2, kind: input, shape index: {}]
  %s3 = inlined_call_operand.vmem [shape: f32[1,32], index: 3, kind: input, shape index: {}]
  %s4 = inlined_call_operand.vmem [shape: f32[1,256], index: 4, kind: input, shape index: {}]
  %s5 = inlined_call_operand.hbm [shape: f32[1,512], index: 5, kind: output, shape index: {}]
  %s6 = sld [smem:[#allocation0]]
  $region65: #{tpu_custom_call.1} parent=0
    _
  %s8 = ssub.s32 1, %s6
  %s9 = scalar_select 0, %s8, %s6
  $region1: #{tpu_custom_call.1} parent=0
    #allocation2 [shape = 'u8[2048]{0}', space=vmem, size = 0x800, scoped, tag = 'input window, operand 0']
    #allocation3 [shape = 's32[2]{0}', space=sflag, size = 0x8, scoped, tag = 'scoped memory for tpu_custom_call.1']
    #allocation4 [shape = 's32[2]{0}', space=sflag, size = 0x8, scoped, tag = 'scoped memory for tpu_custom_call.1']
    #allocation5 [shape = 'u8[2048]{0}', space=vmem, size = 0x800, scoped, tag = 'input window, operand 1']
    #allocation6 [shape = 's32[2]{0}', space=sflag, size = 0x8, scoped, tag = 'scoped memory for tpu_custom_call.1']
    #allocation7 [shape = 'u8[8192]{0}', space=vmem, size = 0x2000, scoped, tag = 'input window, operand 2, single buffered']
    #allocation8 [shape = 'u8[2048]{0}', space=vmem, size = 0x800, scoped, tag = 'output window, operand 0']
    %10 = vsyncpa [#allocation3], 0
    %s11 = scalar_lea.sflag [#allocation3], 1
    %12 = vsyncpa %s11, 0
    %13 = vsyncpa [#allocation6], 0
    %s14 = scalar_lea.sflag [#allocation6], 1
    %15 = vsyncpa %s14, 0
    %16 = vsyncpa [#allocation4], 0
    %s17 = scalar_lea.sflag [#allocation4], 1
    %18 = vsyncpa %s17, 0
    loop: start=0, step=1, limit=4
    $region2: #{tpu_custom_call.1} parent=1 // loop_pre_header
      _
    $region3: #{tpu_custom_call.1} parent=1 // loop_header
      %s20 = sphi 0, %s24
      %p21 = scmp.ge.s32.totalorder %s20, 4
      %s30 = sphi 0, %s32
      %s33 = sphi 0, %s30
      %s34 = sphi 0, %s33
      %s50 = sphi 0, %s34
      %s56 = sphi 0, %s58
      %s59 = sphi 0, %s56
      %s60 = sphi 0, %s59
      %s76 = sphi 0, %s60
      %s80 = sphi 0, %s80
      %s82 = sphi 0, %s80
      %s83 = sphi 0, %s82
      %s97 = sphi 0, %s83
      %s101 = sphi 0, %s101
      %s103 = sphi 0, %s101
      %s104 = sphi 0, %s103
      %s118 = sphi 0, %s104
      %s122 = sphi 0, %s122
      %s124 = sphi 0, %s122
      %s125 = sphi 0, %s124
      %s139 = sphi 0, %s125
      %s145 = sphi 0, %s147
      %s148 = sphi 0, %s145
      %s149 = sphi 0, %s148
      %s165 = sphi 0, %s149
    $region4: #{tpu_custom_call.1} parent=1 // loop_header_branch
      %23 = sbr.rel (%p21) target = $region8
    $region5: #{tpu_custom_call.1} parent=1 // loop_body
      %s25 = ssub.s32 %s20, 1
      %s26 = ssub.s32 %s20, 2
      %s27 = sadd.s32 %s20, 1
      %s28 = ssub.s32 %s20, %s27
      %p29 = scmp.eq.s32.totalorder %s28, 0
      %s31 = sadd.s32 %s30, 1
      %s32 = scalar_select %p29, %s30, %s31
      %p35 = pneg %p29
      %p36 = scmp.eq.s32.totalorder %s20, 1
      %p37 = por %p35, %p36
      %p38 = scmp.ne.s32.totalorder %s30, %s33
      %p39 = scmp.eq.s32.totalorder %s20, 0
      %p40 = por %p38, %p39
      %p41 = scmp.ne.s32.totalorder %s30, %s33
      %p42 = scmp.eq.s32.totalorder %s25, 1
      %p43 = por %p41, %p42
      %p44 = scmp.ne.s32.totalorder %s33, %s34
      %p45 = scmp.eq.s32.totalorder %s25, 0
      %p46 = por %p44, %p45
      %p47 = scmp.ne.s32.totalorder %s33, %s34
      %p48 = scmp.eq.s32.totalorder %s26, 1
      %p49 = por %p47, %p48
      %p51 = scmp.ne.s32.totalorder %s34, %s50
      %p52 = scmp.eq.s32.totalorder %s26, 0
      %p53 = por %p51, %p52
      %s54 = ssub.s32 %s20, %s27
      %p55 = scmp.eq.s32.totalorder %s54, 0
      %s57 = sadd.s32 %s56, 1
      %s58 = scalar_select %p55, %s56, %s57
      %p61 = pneg %p55
      %p62 = scmp.eq.s32.totalorder %s20, 1
      %p63 = por %p61, %p62
      %p64 = scmp.ne.s32.totalorder %s56, %s59
      %p65 = scmp.eq.s32.totalorder %s20, 0
      %p66 = por %p64, %p65
      %p67 = scmp.ne.s32.totalorder %s56, %s59
      %p68 = scmp.eq.s32.totalorder %s25, 1
      %p69 = por %p67, %p68
      %p70 = scmp.ne.s32.totalorder %s59, %s60
      %p71 = scmp.eq.s32.totalorder %s25, 0
      %p72 = por %p70, %p71
      %p73 = scmp.ne.s32.totalorder %s59, %s60
      %p74 = scmp.eq.s32.totalorder %s26, 1
      %p75 = por %p73, %p74
      %p77 = scmp.ne.s32.totalorder %s60, %s76
      %p78 = scmp.eq.s32.totalorder %s26, 0
      %p79 = por %p77, %p78
      %s81 = sadd.s32 %s80, 1
      %p84 = scmp.eq.s32.totalorder %s20, 1
      %p85 = scmp.ne.s32.totalorder %s80, %s82
      %p86 = scmp.eq.s32.totalorder %s20, 0
      %p87 = por %p85, %p86
      %p88 = scmp.ne.s32.totalorder %s80, %s82
      %p89 = scmp.eq.s32.totalorder %s25, 1
      %p90 = por %p88, %p89
      %p91 = scmp.ne.s32.totalorder %s82, %s83
      %p92 = scmp.eq.s32.totalorder %s25, 0
      %p93 = por %p91, %p92
      %p94 = scmp.ne.s32.totalorder %s82, %s83
      %p95 = scmp.eq.s32.totalorder %s26, 1
      %p96 = por %p94, %p95
      %p98 = scmp.ne.s32.totalorder %s83, %s97
      %p99 = scmp.eq.s32.totalorder %s26, 0
      %p100 = por %p98, %p99
      %s102 = sadd.s32 %s101, 1
      %p105 = scmp.eq.s32.totalorder %s20, 1
      %p106 = scmp.ne.s32.totalorder %s101, %s103
      %p107 = scmp.eq.s32.totalorder %s20, 0
      %p108 = por %p106, %p107
      %p109 = scmp.ne.s32.totalorder %s101, %s103
      %p110 = scmp.eq.s32.totalorder %s25, 1
      %p111 = por %p109, %p110
      %p112 = scmp.ne.s32.totalorder %s103, %s104
      %p113 = scmp.eq.s32.totalorder %s25, 0
      %p114 = por %p112, %p113
      %p115 = scmp.ne.s32.totalorder %s103, %s104
      %p116 = scmp.eq.s32.totalorder %s26, 1
      %p117 = por %p115, %p116
      %p119 = scmp.ne.s32.totalorder %s104, %s118
      %p120 = scmp.eq.s32.totalorder %s26, 0
      %p121 = por %p119, %p120
      %s123 = sadd.s32 %s122, 1
      %p126 = scmp.eq.s32.totalorder %s20, 1
      %p127 = scmp.ne.s32.totalorder %s122, %s124
      %p128 = scmp.eq.s32.totalorder %s20, 0
      %p129 = por %p127, %p128
      %p130 = scmp.ne.s32.totalorder %s122, %s124
      %p131 = scmp.eq.s32.totalorder %s25, 1
      %p132 = por %p130, %p131
      %p133 = scmp.ne.s32.totalorder %s124, %s125
      %p134 = scmp.eq.s32.totalorder %s25, 0
      %p135 = por %p133, %p134
      %p136 = scmp.ne.s32.totalorder %s124, %s125
      %p137 = scmp.eq.s32.totalorder %s26, 1
      %p138 = por %p136, %p137
      %p140 = scmp.ne.s32.totalorder %s125, %s139
      %p141 = scmp.eq.s32.totalorder %s26, 0
      %p142 = por %p140, %p141
      %s143 = ssub.s32 %s20, %s27
      %p144 = scmp.eq.s32.totalorder %s143, 0
      %s146 = sadd.s32 %s145, 1
      %s147 = scalar_select %p144, %s145, %s146
      %p150 = pneg %p144
      %p151 = scmp.eq.s32.totalorder %s20, 1
      %p152 = por %p150, %p151
      %p153 = scmp.ne.s32.totalorder %s145, %s148
      %p154 = scmp.eq.s32.totalorder %s20, 0
      %p155 = por %p153, %p154
      %p156 = scmp.ne.s32.totalorder %s145, %s148
      %p157 = scmp.eq.s32.totalorder %s25, 1
      %p158 = por %p156, %p157
      %p159 = scmp.ne.s32.totalorder %s148, %s149
      %p160 = scmp.eq.s32.totalorder %s25, 0
      %p161 = por %p159, %p160
      %p162 = scmp.ne.s32.totalorder %s148, %s149
      %p163 = scmp.eq.s32.totalorder %s26, 1
      %p164 = por %p162, %p163
      %p166 = scmp.ne.s32.totalorder %s149, %s165
      %p167 = scmp.eq.s32.totalorder %s26, 0
      %p168 = por %p166, %p167
      %p169 = scmp.le.s32.totalorder 1, %s20
      %p170 = scmp.lt.s32.totalorder %s20, 3
      %p171 = pnand %p169, %p170
      %p172 = pneg %p171
      // Predicated region
      $region9: #{tpu_custom_call.1} parent=5 // pred_check
        _
      $region10: #{tpu_custom_call.1} parent=5 // pred_check_branch
        %174 = sbr.rel (%p171) target = $region12
      $region11: #{tpu_custom_call.1} parent=5 // pred_region
        %s175 = ssub.s32 %s20, 1
        // Predicated region
        $region13: #{tpu_custom_call.1} parent=11 // pred_check
          %p176 = pneg %p93
        $region14: #{tpu_custom_call.1} parent=11 // pred_check_branch
          %178 = sbr.rel (%p176) target = $region16
        $region15: #{tpu_custom_call.1} parent=11 // pred_region
          %s180 = ssub.s32 256, 256
          %181 = vsyncadd [#allocation6], %s180
          %s182 = sshll.u32 [#allocation7], 4
          %s183 = int_to_ptr.vmem [resolvable:$true] %s182
          %188 = dma.hbm_to_vmem [thread:$0]  %s2, 256, %s183, [#allocation6], 64, 64, 4
        $region16: #{tpu_custom_call.1} parent=11 // pred_fallthru
          _
        // Predicated region
        $region17: #{tpu_custom_call.1} parent=11 // pred_check
          %p189 = pneg %p114
        $region18: #{tpu_custom_call.1} parent=11 // pred_check_branch
          %191 = sbr.rel (%p189) target = $region20
        $region19: #{tpu_custom_call.1} parent=11 // pred_region
          _
        $region20: #{tpu_custom_call.1} parent=11 // pred_fallthru
          _
        // Predicated region
        $region21: #{tpu_custom_call.1} parent=11 // pred_check
          %p192 = pneg %p135
        $region22: #{tpu_custom_call.1} parent=11 // pred_check_branch
          %194 = sbr.rel (%p192) target = $region24
        $region23: #{tpu_custom_call.1} parent=11 // pred_region
          _
        $region24: #{tpu_custom_call.1} parent=11 // pred_fallthru
          _
      $region12: #{tpu_custom_call.1} parent=5 // pred_fallthru
        _
      %p195 = scmp.lt.s32.totalorder %s20, 2
      // Predicated region
      $region25: #{tpu_custom_call.1} parent=5 // pred_check
        %p196 = pneg %p195
      $region26: #{tpu_custom_call.1} parent=5 // pred_check_branch
        %198 = sbr.rel (%p196) target = $region28
      $region27: #{tpu_custom_call.1} parent=5 // pred_region
        // Predicated region
        $region29: #{tpu_custom_call.1} parent=27 // pred_check
          %p199 = pneg %p40
        $region30: #{tpu_custom_call.1} parent=27 // pred_check_branch
          %201 = sbr.rel (%p199) target = $region32
        $region31: #{tpu_custom_call.1} parent=27 // pred_region
          %s202 = sand.u32 %s30, 1
          %s203 = scalar_lea.sflag [#allocation3], %s202
          %s204 = sand.u32 %s30, 1
          %s205 = smul.addr %s204, 2
          %s206 = scalar_lea.vmem [#allocation2], %s205
          %s207 = smul.u32 2, %s20
          %s209 = ssub.s32 32, 32
          %210 = vsyncadd %s203, %s209
          %s211 = smul.addr %s207, 16
          %s212 = scalar_lea.hbm %s0, %s211
          %s214 = sshll.u32 %s206, 4
          %s215 = int_to_ptr.vmem [resolvable:$true] %s214
          %217 = dma.hbm_to_vmem [thread:$0]  %s212, 32, %s215, %s203
        $region32: #{tpu_custom_call.1} parent=27 // pred_fallthru
          _
        // Predicated region
        $region33: #{tpu_custom_call.1} parent=27 // pred_check
          %p218 = pneg %p66
        $region34: #{tpu_custom_call.1} parent=27 // pred_check_branch
          %220 = sbr.rel (%p218) target = $region36
        $region35: #{tpu_custom_call.1} parent=27 // pred_region
          %s221 = sand.u32 %s20, 1
          %s222 = scalar_lea.sflag [#allocation6], %s221
          %s223 = sand.u32 %s56, 1
          %s224 = smul.addr %s223, 2
          %s225 = scalar_lea.vmem [#allocation5], %s224
          %s226 = smul.u32 2, %s20
          %s228 = ssub.s32 32, 32
          %229 = vsyncadd %s222, %s228
          %s230 = smul.addr %s226, 16
          %s231 = scalar_lea.hbm %s1, %s230
          %s233 = sshll.u32 %s225, 4
          %s234 = int_to_ptr.vmem [resolvable:$true] %s233
          %236 = dma.hbm_to_vmem [thread:$0]  %s231, 32, %s234, %s222
        $region36: #{tpu_custom_call.1} parent=27 // pred_fallthru
          _
      $region28: #{tpu_custom_call.1} parent=5 // pred_fallthru
        _
      %p237 = scmp.le.s32.totalorder 1, %s20
      %p238 = scmp.lt.s32.totalorder %s20, 3
      %p239 = pnand %p237, %p238
      %p240 = pneg %p239
      // Predicated region
      $region37: #{tpu_custom_call.1} parent=5 // pred_check
        _
      $region38: #{tpu_custom_call.1} parent=5 // pred_check_branch
        %242 = sbr.rel (%p239) target = $region40
      $region39: #{tpu_custom_call.1} parent=5 // pred_region
        %s243 = ssub.s32 %s20, 1
        %s244 = sand.u32 %s33, 1
        %s245 = scalar_lea.sflag [#allocation3], %s244
        %s246 = sand.u32 %s33, 1
        %s247 = smul.addr %s246, 2
        %s248 = scalar_lea.vmem [#allocation2], %s247
        // Predicated region
        $region41: #{tpu_custom_call.1} parent=39 // pred_check
          %p249 = pneg %p46
        $region42: #{tpu_custom_call.1} parent=39 // pred_check_branch
          %251 = sbr.rel (%p249) target = $region44
        $region43: #{tpu_custom_call.1} parent=39 // pred_region
          %252 = dma.done %s245, 32
        $region44: #{tpu_custom_call.1} parent=39 // pred_fallthru
          _
        %s253 = sand.u32 %s25, 1
        %s254 = scalar_lea.sflag [#allocation6], %s253
        %s255 = sand.u32 %s59, 1
        %s256 = smul.addr %s255, 2
        %s257 = scalar_lea.vmem [#allocation5], %s256
        // Predicated region
        $region45: #{tpu_custom_call.1} parent=39 // pred_check
          %p258 = pneg %p72
        $region46: #{tpu_custom_call.1} parent=39 // pred_check_branch
          %260 = sbr.rel (%p258) target = $region48
        $region47: #{tpu_custom_call.1} parent=39 // pred_region
          %261 = dma.done %s254, 32
        $region48: #{tpu_custom_call.1} parent=39 // pred_fallthru
          _
        // Predicated region
        $region49: #{tpu_custom_call.1} parent=39 // pred_check
          %p262 = pneg %p93
        $region50: #{tpu_custom_call.1} parent=39 // pred_check_branch
          %264 = sbr.rel (%p262) target = $region52
        $region51: #{tpu_custom_call.1} parent=39 // pred_region
          %265 = dma.done [#allocation6], 256
        $region52: #{tpu_custom_call.1} parent=39 // pred_fallthru
          _
        %s266 = sand.u32 %s33, 1
        %s267 = scalar_lea.sflag [#allocation3], %s266
        %s268 = sand.u32 %s33, 1
        %s269 = smul.addr %s268, 2
        %s270 = scalar_lea.vmem [#allocation2], %s269
        %p271 = pneg %p46
        %p272 = pneg %p43
        %s273 = sand.u32 %s25, 1
        %s274 = scalar_lea.sflag [#allocation6], %s273
        %s275 = sand.u32 %s59, 1
        %s276 = smul.addr %s275, 2
        %s277 = scalar_lea.vmem [#allocation5], %s276
        %p278 = pneg %p72
        %p279 = pneg %p69
        %p280 = pneg %p93
        %p281 = pneg %p90
        %p282 = pneg %p114
        %p283 = pneg %p111
        %p284 = pneg %p135
        %p285 = pneg %p132
        %p286 = pneg %p161
        %p287 = pneg %p158
        %s288 = sand.u32 %s148, 1
        %s289 = scalar_lea.sflag [#allocation4], %s288
        %s290 = sand.u32 %s148, 1
        %s291 = smul.addr %s290, 2
        %s292 = scalar_lea.vmem [#allocation8], %s291
        %s293 = smul.u32 2, %s25
        %s294 = smul.u32 2, %s25
        %s295 = smul.u32 2, %s25
        %v297 = vld [vmem:[%s248] sm:$0x3]
        %v298 = vlaneseq
        %v299 = vshrl.u32 %v298, 7
        %v300 = vadd.s32 %v299, 8
        %v301 = vadd.s32 %v299, 16
        %v302 = vadd.s32 %v299, 24
        %v303 = vadd.s32 %v299, 32
        %v304 = vadd.s32 %v299, 40
        %v305 = vadd.s32 %v299, 48
        %v306 = vadd.s32 %v299, 56
        %v307 = vadd.s32 %v299, 64
        %v308 = vadd.s32 %v299, 72
        %v309 = vadd.s32 %v299, 80
        %v310 = vadd.s32 %v299, 88
        %v311 = vadd.s32 %v299, 96
        %v312 = vadd.s32 %v299, 104
        %v313 = vadd.s32 %v299, 112
        %v314 = vadd.s32 %v299, 120
        %v315 = vlaneseq
        %v316 = vshrl.u32 %v315, 7
        %v317 = vsub.s32 0, %v316
        %v318 = vrot.slane %v297, %v317
        %v319 = vlaneseq
        %v320 = vshrl.u32 %v319, 7
        %v321 = vsub.s32 1, %v320
        %v322 = vrot.slane %v297, %v321
        %vm323 = vcmp.eq.s32.totalorder %v299, %v318
        %vm324 = vcmp.eq.s32.totalorder %v299, %v322
        %vm325 = vcmp.eq.s32.totalorder %v300, %v318
        %vm326 = vcmp.eq.s32.totalorder %v300, %v322
        %vm327 = vcmp.eq.s32.totalorder %v301, %v318
        %vm328 = vcmp.eq.s32.totalorder %v301, %v322
        %vm329 = vcmp.eq.s32.totalorder %v302, %v318
        %vm330 = vcmp.eq.s32.totalorder %v302, %v322
        %vm331 = vcmp.eq.s32.totalorder %v303, %v318
        %vm332 = vcmp.eq.s32.totalorder %v303, %v322
        %vm333 = vcmp.eq.s32.totalorder %v304, %v318
        %vm334 = vcmp.eq.s32.totalorder %v304, %v322
        %vm335 = vcmp.eq.s32.totalorder %v305, %v318
        %vm336 = vcmp.eq.s32.totalorder %v305, %v322
        %vm337 = vcmp.eq.s32.totalorder %v306, %v318
        %vm338 = vcmp.eq.s32.totalorder %v306, %v322
        %vm339 = vcmp.eq.s32.totalorder %v307, %v318
        %vm340 = vcmp.eq.s32.totalorder %v307, %v322
        %vm341 = vcmp.eq.s32.totalorder %v308, %v318
        %vm342 = vcmp.eq.s32.totalorder %v308, %v322
        %vm343 = vcmp.eq.s32.totalorder %v309, %v318
        %vm344 = vcmp.eq.s32.totalorder %v309, %v322
        %vm345 = vcmp.eq.s32.totalorder %v310, %v318
        %vm346 = vcmp.eq.s32.totalorder %v310, %v322
        %vm347 = vcmp.eq.s32.totalorder %v311, %v318
        %vm348 = vcmp.eq.s32.totalorder %v311, %v322
        %vm349 = vcmp.eq.s32.totalorder %v312, %v318
        %vm350 = vcmp.eq.s32.totalorder %v312, %v322
        %vm351 = vcmp.eq.s32.totalorder %v313, %v318
        %vm352 = vcmp.eq.s32.totalorder %v313, %v322
        %vm353 = vcmp.eq.s32.totalorder %v314, %v318
        %vm354 = vcmp.eq.s32.totalorder %v314, %v322
        %v355 = vsel %vm323, 1, 0
        %v356 = vsel %vm324, 1, 0
        %v357 = vsel %vm325, 1, 0
        %v358 = vsel %vm326, 1, 0
        %v359 = vsel %vm327, 1, 0
        %v360 = vsel %vm328, 1, 0
        %v361 = vsel %vm329, 1, 0
        %v362 = vsel %vm330, 1, 0
        %v363 = vsel %vm331, 1, 0
        %v364 = vsel %vm332, 1, 0
        %v365 = vsel %vm333, 1, 0
        %v366 = vsel %vm334, 1, 0
        %v367 = vsel %vm335, 1, 0
        %v368 = vsel %vm336, 1, 0
        %v369 = vsel %vm337, 1, 0
        %v370 = vsel %vm338, 1, 0
        %v371 = vsel %vm339, 1, 0
        %v372 = vsel %vm340, 1, 0
        %v373 = vsel %vm341, 1, 0
        %v374 = vsel %vm342, 1, 0
        %v375 = vsel %vm343, 1, 0
        %v376 = vsel %vm344, 1, 0
        %v377 = vsel %vm345, 1, 0
        %v378 = vsel %vm346, 1, 0
        %v379 = vsel %vm347, 1, 0
        %v380 = vsel %vm348, 1, 0
        %v381 = vsel %vm349, 1, 0
        %v382 = vsel %vm350, 1, 0
        %v383 = vsel %vm351, 1, 0
        %v384 = vsel %vm352, 1, 0
        %v385 = vsel %vm353, 1, 0
        %v386 = vsel %vm354, 1, 0
        %v387 = vcvt.s32.f32 %v355
        %v388 = vcvt.s32.f32 %v356
        %v389 = vcvt.s32.f32 %v357
        %v390 = vcvt.s32.f32 %v358
        %v391 = vcvt.s32.f32 %v359
        %v392 = vcvt.s32.f32 %v360
        %v393 = vcvt.s32.f32 %v361
        %v394 = vcvt.s32.f32 %v362
        %v395 = vcvt.s32.f32 %v363
        %v396 = vcvt.s32.f32 %v364
        %v397 = vcvt.s32.f32 %v365
        %v398 = vcvt.s32.f32 %v366
        %v399 = vcvt.s32.f32 %v367
        %v400 = vcvt.s32.f32 %v368
        %v401 = vcvt.s32.f32 %v369
        %v402 = vcvt.s32.f32 %v370
        %v403 = vcvt.s32.f32 %v371
        %v404 = vcvt.s32.f32 %v372
        %v405 = vcvt.s32.f32 %v373
        %v406 = vcvt.s32.f32 %v374
        %v407 = vcvt.s32.f32 %v375
        %v408 = vcvt.s32.f32 %v376
        %v409 = vcvt.s32.f32 %v377
        %v410 = vcvt.s32.f32 %v378
        %v411 = vcvt.s32.f32 %v379
        %v412 = vcvt.s32.f32 %v380
        %v413 = vcvt.s32.f32 %v381
        %v414 = vcvt.s32.f32 %v382
        %v415 = vcvt.s32.f32 %v383
        %v416 = vcvt.s32.f32 %v384
        %v417 = vcvt.s32.f32 %v385
        %v418 = vcvt.s32.f32 %v386
        %v419 = vpack.c.bf16 %v389, %v387
        %v420 = vpack.c.bf16 %v390, %v388
        %v421 = vpack.c.bf16 %v393, %v391
        %v422 = vpack.c.bf16 %v394, %v392
        %v423 = vpack.c.bf16 %v397, %v395
        %v424 = vpack.c.bf16 %v398, %v396
        %v425 = vpack.c.bf16 %v401, %v399
        %v426 = vpack.c.bf16 %v402, %v400
        %v427 = vpack.c.bf16 %v405, %v403
        %v428 = vpack.c.bf16 %v406, %v404
        %v429 = vpack.c.bf16 %v409, %v407
        %v430 = vpack.c.bf16 %v410, %v408
        %v431 = vpack.c.bf16 %v413, %v411
        %v432 = vpack.c.bf16 %v414, %v412
        %v433 = vpack.c.bf16 %v417, %v415
        %v434 = vpack.c.bf16 %v418, %v416
        %v435 = vld [vmem:[#allocation7] sm:$0xf]
        %v436 = vld [vmem:[#allocation7 + $0x4] sm:$0xf]
        %v437 = vld [vmem:[#allocation7 + $0x8] sm:$0xf]
        %v438 = vld [vmem:[#allocation7 + $0xc] sm:$0xf]
        %v443 = vunpack.c.l.b16 %v435
        %v444 = vunpack.c.l.b16 %v436
        %v445 = vunpack.c.l.b16 %v437
        %v446 = vunpack.c.l.b16 %v438
        %v447 = vpack.c.b16 %v444, %v443
        %v448 = vpack.c.b16 %v446, %v445
        %451 = vmatprep.subr.bf16.mxu0 %v420
        %452 = vmatpush1.bf16.msra.mxu0 %v419
        %453 = vmatprep.subr.bf16.mxu0 %v422
        %454 = vmatpush1.bf16.msra.mxu0 %v421
        %455 = vmatprep.subr.bf16.mxu0 %v424
        %456 = vmatpush1.bf16.msra.mxu0 %v423
        %457 = vmatprep.subr.bf16.mxu0 %v426
        %458 = vmatpush1.bf16.msra.mxu0 %v425
        %459 = vmatprep.subr.bf16.mxu0 %v428
        %460 = vmatpush1.bf16.msra.mxu0 %v427
        %461 = vmatprep.subr.bf16.mxu0 %v430
        %462 = vmatpush1.bf16.msra.mxu0 %v429
        %463 = vmatprep.subr.bf16.mxu0 %v432
        %464 = vmatpush1.bf16.msra.mxu0 %v431
        %465 = vmatprep.subr.bf16.mxu0 %v434
        %466 = vmatpush1.bf16.msra.mxu0 %v433
        %467 = vmatprep.subr.bf16.mxu0 0
        %468 = vmatpush1.bf16.msra.mxu0 0
        %469 = vmatprep.subr.bf16.mxu0 0
        %470 = vmatpush1.bf16.msra.mxu0 0
        %471 = vmatprep.subr.bf16.mxu0 0
        %472 = vmatpush1.bf16.msra.mxu0 0
        %473 = vmatprep.subr.bf16.mxu0 0
        %474 = vmatpush1.bf16.msra.mxu0 0
        %475 = vmatprep.subr.bf16.mxu0 0
        %476 = vmatpush1.bf16.msra.mxu0 0
        %477 = vmatprep.subr.bf16.mxu0 0
        %478 = vmatpush1.bf16.msra.mxu0 0
        %479 = vmatprep.subr.bf16.mxu0 0
        %480 = vmatpush1.bf16.msra.mxu0 0
        %481 = vmatprep.subr.bf16.mxu0 0
        %482 = vmatpush1.bf16.msra.mxu0 0
        %483 = vmatprep.mubr.bf16.mxu0 0
        %484 = vmatmul.mubr.bf16.gmra.mrb[0].mxu0 %v447
        %v485 = vpop.f32.mrb[0].mxu0
        %v486 = vadd.f32 0.0, %v485
        %v487 = vpop.f32.mrb[0].mxu0
        %v488 = vadd.f32 0.0, %v487
        %v489 = vpop.f32.mrb[0].mxu0
        %v490 = vadd.f32 0.0, %v489
        %v491 = vpop.f32.mrb[0].mxu0
        %v492 = vadd.f32 0.0, %v491
        %493 = vmatprep.mubr.bf16.mxu0 0
        %494 = vmatmul.mubr.bf16.gmra.mrb[0].mxu0 %v448
        %v495 = vpop.f32.mrb[0].mxu0
        %v496 = vadd.f32 0.0, %v495
        %v497 = vpop.f32.mrb[0].mxu0
        %v498 = vadd.f32 0.0, %v497
        %v499 = vpop.f32.mrb[0].mxu0
        %v500 = vadd.f32 0.0, %v499
        %v501 = vpop.f32.mrb[0].mxu0
        %v502 = vadd.f32 0.0, %v501
        %503 = vdwg.mxu0
        %v504 = vmax.f32 %v486, 0.0
        %v505 = vmax.f32 %v488, 0.0
        %v506 = vmax.f32 %v490, 0.0
        %v507 = vmax.f32 %v492, 0.0
        %v508 = vmax.f32 %v496, 0.0
        %v509 = vmax.f32 %v498, 0.0
        %v510 = vmax.f32 %v500, 0.0
        %v511 = vmax.f32 %v502, 0.0
        %v512 = vld [vmem:[%s3] sm:$0x1]
        %v513 = vld [vmem:[%s257] sm:$0x3]
        %v514 = vld [vmem:[%s4] sm:$0x3]
        %v516 = vlaneseq
        %v517 = vshrl.u32 %v516, 7
        %v518 = vsub.s32 0, %v517
        %v519 = vrot.slane %v514, %v518
        %v520 = vlaneseq
        %v521 = vshrl.u32 %v520, 7
        %v522 = vsub.s32 1, %v521
        %v523 = vrot.slane %v514, %v522
        %vm526 = vcmask 261120
        %v528 = vsel %vm526, %v512, 0
        %530 = vmatprep.subr.mxu0 %v505
        %531 = vmatpush1.msra.mxu0 %v504
        %532 = vmatprep.subr.mxu0 %v507
        %533 = vmatpush1.msra.mxu0 %v506
        %534 = vmatprep.subr.mxu0 %v509
        %535 = vmatpush1.msra.mxu0 %v508
        %536 = vmatprep.subr.mxu0 %v511
        %537 = vmatpush1.msra.mxu0 %v510
        %538 = vmatprep.subr.mxu0 0.0
        %539 = vmatpush1.msra.mxu0 0.0
        %540 = vmatprep.subr.mxu0 0.0
        %541 = vmatpush1.msra.mxu0 0.0
        %542 = vmatprep.subr.mxu0 0.0
        %543 = vmatpush1.msra.mxu0 0.0
        %544 = vmatprep.subr.mxu0 0.0
        %545 = vmatpush1.msra.mxu0 0.0
        %546 = vmatprep.subr.mxu0 0.0
        %547 = vmatpush1.msra.mxu0 0.0
        %548 = vmatprep.subr.mxu0 0.0
        %549 = vmatpush1.msra.mxu0 0.0
        %550 = vmatprep.subr.mxu0 0.0
        %551 = vmatpush1.msra.mxu0 0.0
        %552 = vmatprep.subr.mxu0 0.0
        %553 = vmatpush1.msra.mxu0 0.0
        %554 = vmatprep.subr.mxu0 0.0
        %555 = vmatpush1.msra.mxu0 0.0
        %556 = vmatprep.subr.mxu0 0.0
        %557 = vmatpush1.msra.mxu0 0.0
        %558 = vmatprep.subr.mxu0 0.0
        %559 = vmatpush1.msra.mxu0 0.0
        %560 = vmatprep.subr.mxu0 0.0
        %561 = vmatpush1.msra.mxu0 0.0
        %562 = vmatprep.subr.mxu0 0.0
        %563 = vmatpush1.msra.mxu0 0.0
        %564 = vmatprep.subr.mxu0 0.0
        %565 = vmatpush1.msra.mxu0 0.0
        %566 = vmatprep.subr.mxu0 0.0
        %567 = vmatpush1.msra.mxu0 0.0
        %568 = vmatprep.subr.mxu0 0.0
        %569 = vmatpush1.msra.mxu0 0.0
        %570 = vmatprep.subr.mxu0 0.0
        %571 = vmatpush1.msra.mxu0 0.0
        %572 = vmatprep.subr.mxu0 0.0
        %573 = vmatpush1.msra.mxu0 0.0
        %574 = vmatprep.subr.mxu0 0.0
        %575 = vmatpush1.msra.mxu0 0.0
        %576 = vmatprep.subr.mxu0 0.0
        %577 = vmatpush1.msra.mxu0 0.0
        %578 = vmatprep.subr.mxu0 0.0
        %579 = vmatpush1.msra.mxu0 0.0
        %580 = vmatprep.subr.mxu0 0.0
        %581 = vmatpush1.msra.mxu0 0.0
        %582 = vmatprep.subr.mxu0 0.0
        %583 = vmatpush1.msra.mxu0 0.0
        %584 = vmatprep.subr.mxu0 0.0
        %585 = vmatpush1.msra.mxu0 0.0
        %586 = vmatprep.subr.mxu0 0.0
        %587 = vmatpush1.msra.mxu0 0.0
        %588 = vmatprep.subr.mxu0 0.0
        %589 = vmatpush1.msra.mxu0 0.0
        %590 = vmatprep.subr.mxu0 0.0
        %591 = vmatpush1.msra.mxu0 0.0
        %592 = vmatprep.subr.mxu0 0.0
        %593 = vmatpush1.msra.mxu0 0.0
        %594 = vmatprep.mubr.f32.mxu0 0.0
        %595 = vmatmul.mubr.f32.gmra.mrb[0].mxu0 %v528
        %v596 = vpop.f32.mrb[0].mxu0
        %v597 = vadd.f32 %v519, %v596
        %v598 = vpop.f32.mrb[0].mxu0
        %v599 = vadd.f32 %v523, %v598
        %600 = vdwg.mxu0
        %v601 = vmul.f32 %v597, 1.442695
        %v602 = vpow.pop %v601
        %v603 = vmul.f32 %v599, 1.442695
        %v604 = vpow.pop %v603
        %v607 = vcombine.low %v602, %v604
        %v609 = vunpack.c.l.s4 1966171168
        %v610 = vunpack.c.0.s8 %v609
        %v611 = vlaneseq
        %v612 = vshrl.u32 %v611, 7
        %v613 = vsub.s32 %v610, %v612
        %v614 = vrot.slane %v607, %v613
        %v616 = vunpack.c.l.s4 1966171168
        %v617 = vunpack.c.0.s8 %v616
        %v618 = vlaneseq
        %v619 = vshrl.u32 %v618, 7
        %v620 = vsub.s32 %v617, %v619
        %v621 = vrot.slane %v614, %v620
        %v623 = vmul.f32 %v513, %v621
        %v624 = vlaneseq
        %vm625 = vcmp.ge.s32.totalorder %v624, 0
        %vm626 = vcmp.lt.s32.totalorder %v624, 256
        %vm627 = vmand %vm625, %vm626
        %628 = vst.msk [vmem:[%s292] sm:$0x3] %vm627, %v623
        %s629 = sand.u32 %s148, 1
        %s630 = scalar_lea.sflag [#allocation4], %s629
        %s631 = sand.u32 %s148, 1
        %s632 = smul.addr %s631, 2
        %s633 = scalar_lea.vmem [#allocation8], %s632
        // Predicated region
        $region53: #{tpu_custom_call.1} parent=39 // pred_check
          %p634 = pneg %p158
        $region54: #{tpu_custom_call.1} parent=39 // pred_check_branch
          %636 = sbr.rel (%p634) target = $region56
        $region55: #{tpu_custom_call.1} parent=39 // pred_region
          %s637 = smul.u32 2, %s25
          %s639 = ssub.s32 32, 32
          %640 = vsyncadd %s630, %s639
          %s641 = smul.addr %s637, 16
          %s642 = scalar_lea.hbm %s5, %s641
          %s644 = sshll.u32 %s633, 4
          %s645 = int_to_ptr.vmem [resolvable:$true] %s644
          %647 = dma.vmem_to_hbm [thread:$0]  %s645, 32, %s642, %s630
        $region56: #{tpu_custom_call.1} parent=39 // pred_fallthru
          _
      $region40: #{tpu_custom_call.1} parent=5 // pred_fallthru
        _
      %p648 = scmp.le.s32.totalorder 2, %s20
      // Predicated region
      $region57: #{tpu_custom_call.1} parent=5 // pred_check
        %p649 = pneg %p648
      $region58: #{tpu_custom_call.1} parent=5 // pred_check_branch
        %651 = sbr.rel (%p649) target = $region60
      $region59: #{tpu_custom_call.1} parent=5 // pred_region
        %s652 = ssub.s32 %s20, 2
        // Predicated region
        $region61: #{tpu_custom_call.1} parent=59 // pred_check
          %p653 = pneg %p164
        $region62: #{tpu_custom_call.1} parent=59 // pred_check_branch
          %655 = sbr.rel (%p653) target = $region64
        $region63: #{tpu_custom_call.1} parent=59 // pred_region
          %s656 = sand.u32 %s149, 1
          %s657 = scalar_lea.sflag [#allocation4], %s656
          %s658 = sand.u32 %s149, 1
          %s659 = smul.addr %s658, 2
          %s660 = scalar_lea.vmem [#allocation8], %s659
          %661 = dma.done %s657, 32
        $region64: #{tpu_custom_call.1} parent=59 // pred_fallthru
          _
      $region60: #{tpu_custom_call.1} parent=5 // pred_fallthru
        _
    $region6: #{tpu_custom_call.1} parent=1 // loop_footer
      %s24 = sadd.s32 1, %s20
    $region7: #{tpu_custom_call.1} parent=1 // loop_footer_branch
      %19 = sbr.rel target = $region3
    $region8: #{tpu_custom_call.1} parent=1 // loop_exit
      _
    %662 = vsyncpa [#allocation3], 1
    %s663 = scalar_lea.sflag [#allocation3], 1
    %664 = vsyncpa %s663, 1
    %665 = vsyncpa [#allocation6], 1
    %s666 = scalar_lea.sflag [#allocation6], 1
    %667 = vsyncpa %s666, 1
    %668 = vsyncpa [#allocation4], 1
    %s669 = scalar_lea.sflag [#allocation4], 1
    %670 = vsyncpa %s669, 1

</llo_original>
